<compile_context>
chip_gen: v5e
topology: v5e:2x2
jax: 0.10.0
libtpu: 0.0.40
codegen_flags: <defaults>
</compile_context>

<pallas_src>
import jax
import jax.numpy as jnp
import numpy as np
from jax import lax
from jax.experimental import pallas as pl
from jax.experimental.pallas import tpu as pltpu

BN_EPS = 1e-5
_VMEM_SLAB_BUDGET = 8 * 1024 * 1024   # bytes of double-buffered tiles per call
_VMEM_LIMIT = 32 * 1024 * 1024        # scoped VMEM limit (OK on v5e/v6e/v7x)


def _pick_bn(n, cin, cout, p, itemsize):
    # Per sample: h1 + h2 input tiles and one output tile, each double-buffered.
    per_n = 2 * itemsize * (2 * cin + cout) * p
    bn = max(1, _VMEM_SLAB_BUDGET // per_n)
    return int(min(bn, n))


def _make_stats_kernel(bn, n_total):
    """Accumulates per-branch channel sums and Gram matrices over all samples."""
    masked = (n_total % bn) != 0

    def kernel(h1_ref, h2_ref, s1_ref, s2_ref, g1_ref, g2_ref):
        @pl.when(pl.program_id(0) == 0)
        def _():
            s1_ref[...] = jnp.zeros_like(s1_ref)
            s2_ref[...] = jnp.zeros_like(s2_ref)
            g1_ref[...] = jnp.zeros_like(g1_ref)
            g2_ref[...] = jnp.zeros_like(g2_ref)

        n0 = pl.program_id(0) * bn
        nt = (((1,), (1,)), ((), ()))   # contract the lane (pixel) axis of both operands

        @pl.loop(0, bn)
        def _(i):
            def work():
                a1 = jnp.maximum(h1_ref[i].astype(jnp.float32), 0.0)   # (Cin, P)
                a2 = jnp.maximum(h2_ref[i].astype(jnp.float32), 0.0)
                s1_ref[...] += jnp.sum(a1, axis=1, keepdims=True)
                s2_ref[...] += jnp.sum(a2, axis=1, keepdims=True)
                g1_ref[...] += lax.dot_general(a1, a1, nt,
                                               preferred_element_type=jnp.float32)
                g2_ref[...] += lax.dot_general(a2, a2, nt,
                                               preferred_element_type=jnp.float32)

            if masked:
                pl.when(n0 + i < n_total)(work)   # ragged tail batch block
            else:
                work()

    return kernel


def _make_apply_kernel(bn, n_total):
    """y = scaled_W @ relu(h) + shift, written directly in (n, Cout, P) layout."""
    masked = (n_total % bn) != 0

    def kernel(h1_ref, h2_ref, ws1_ref, ws2_ref, sh_ref, o_ref):
        n0 = pl.program_id(0) * bn

        @pl.loop(0, bn)
        def _(i):
            def work():
                a1 = jnp.maximum(h1_ref[i], 0.0)                        # (Cin, P)
                a2 = jnp.maximum(h2_ref[i], 0.0)
                y1 = jnp.dot(ws1_ref[...], a1, preferred_element_type=jnp.float32)
                y2 = jnp.dot(ws2_ref[...], a2, preferred_element_type=jnp.float32)
                y = jnp.concatenate([y1, y2], axis=0) + sh_ref[...]     # (Cout, P)
                o_ref[i] = y.astype(o_ref.dtype)

            if masked:
                pl.when(n0 + i < n_total)(work)
            else:
                work()

    return kernel


def shortcut_forward(x, w1, w2, gamma, beta, stride, *, act_dtype=jnp.float32):
    """x: (N, Cin, H, W).  w1/w2: (Cout//2, Cin) (PyTorch 1x1 conv weights, squeezed).
    gamma/beta: (Cout,).  Returns (N, Cout, Ho, Wo) float32."""
    N, Cin, H, W = x.shape
    Cout = int(gamma.shape[0])
    Co2 = Cout // 2

    # --- glue (XLA): strided subsample == avg_pool2d(k=1, stride) at offsets (0,0)/(1,1).
    # relu is deferred to the kernels (relu(0)=0, so the zero fill commutes with it).
    h1 = x[:, :, ::stride, ::stride]
    Ho, Wo = h1.shape[2], h1.shape[3]
    h2 = x[:, :, 1::stride, 1::stride]
    if h2.shape[2] < Ho or h2.shape[3] < Wo:
        # zero-fill only the tiny missing trailing row/col of the shifted subsample
        h2 = jnp.pad(h2, ((0, 0), (0, 0),
                          (0, Ho - h2.shape[2]), (0, Wo - h2.shape[3])))
    P = Ho * Wo
    M = N * P                                     # BN sample count per channel

    # Free reshapes (no copies): keep the natural per-sample channel-major layout.
    h1 = h1.reshape(N, Cin, P).astype(act_dtype)
    h2 = h2.reshape(N, Cin, P).astype(act_dtype)

    bn = _pick_bn(N, Cin, Cout, P, jnp.dtype(act_dtype).itemsize)
    nb = (N + bn - 1) // bn

    # ---------------- pass 1: per-branch channel sums + Gram matrices ----------------
    s1, s2, g1, g2 = pl.pallas_call(
        _make_stats_kernel(bn, N),
        grid=(nb,),
        in_specs=[
            pl.BlockSpec((bn, Cin, P), lambda b: (b, 0, 0)),
            pl.BlockSpec((bn, Cin, P), lambda b: (b, 0, 0)),
        ],
        out_specs=(
            pl.BlockSpec((Cin, 1), lambda b: (0, 0)),
            pl.BlockSpec((Cin, 1), lambda b: (0, 0)),
            pl.BlockSpec((Cin, Cin), lambda b: (0, 0)),
            pl.BlockSpec((Cin, Cin), lambda b: (0, 0)),
        ),
        out_shape=(
            jax.ShapeDtypeStruct((Cin, 1), jnp.float32),
            jax.ShapeDtypeStruct((Cin, 1), jnp.float32),
            jax.ShapeDtypeStruct((Cin, Cin), jnp.float32),
            jax.ShapeDtypeStruct((Cin, Cin), jnp.float32),
        ),
        compiler_params=pltpu.CompilerParams(
            dimension_semantics=("arbitrary",),       # cross-step accumulation
            vmem_limit_bytes=_VMEM_LIMIT),
    )(h1, h2)

    # ---- tiny O(Cout*Cin) BN-fold math (XLA): mean = W s / M, E[y^2] = diag(W G W^T)/M.
    # Single-sweep E[y^2]-mean^2 in f32; clamp var >= 0 to guard against cancellation.
    w1f = w1.astype(jnp.float32)
    w2f = w2.astype(jnp.float32)
    inv_m = 1.0 / float(M)

    def fold(w, s, g, gam, bet):
        mean = (w @ s) * inv_m                                        # (Co2, 1)
        ey2 = jnp.sum((w @ g) * w, axis=1, keepdims=True) * inv_m     # diag(W G W^T)/M
        var = jnp.maximum(ey2 - mean * mean, 0.0)                     # biased variance
        scale = gam[:, None] * lax.rsqrt(var + BN_EPS)
        shift = bet[:, None] - mean * scale
        return scale * w, shift                                       # scale folded into W

    ws1, sh1 = fold(w1f, s1, g1,
                    gamma[:Co2].astype(jnp.float32), beta[:Co2].astype(jnp.float32))
    ws2, sh2 = fold(w2f, s2, g2,
                    gamma[Co2:].astype(jnp.float32), beta[Co2:].astype(jnp.float32))
    sh = jnp.concatenate([sh1, sh2], axis=0)                          # (Cout, 1) f32
    ws1 = ws1.astype(act_dtype)
    ws2 = ws2.astype(act_dtype)

    # ---------------- pass 2: y = Ws @ relu(h) + shift (fully parallel over batch) ----
    out = pl.pallas_call(
        _make_apply_kernel(bn, N),
        grid=(nb,),
        in_specs=[
            pl.BlockSpec((bn, Cin, P), lambda b: (b, 0, 0)),
            pl.BlockSpec((bn, Cin, P), lambda b: (b, 0, 0)),
            pl.BlockSpec((Co2, Cin), lambda b: (0, 0)),
            pl.BlockSpec((Co2, Cin), lambda b: (0, 0)),
            pl.BlockSpec((Cout, 1), lambda b: (0, 0)),
        ],
        out_specs=pl.BlockSpec((bn, Cout, P), lambda b: (b, 0, 0)),
        out_shape=jax.ShapeDtypeStruct((N, Cout, P), jnp.float32),
        compiler_params=pltpu.CompilerParams(
            dimension_semantics=("parallel",),        # megacore-shardable on v7x
            vmem_limit_bytes=_VMEM_LIMIT),
    )(h1, h2, ws1, ws2, sh)

    return out.reshape(N, Cout, Ho, Wo)               # free reshape back to NCHW


def reference_forward(x, w1, w2, gamma, beta, stride):
    """Pure-JAX reference replicating the PyTorch module (training-mode BN)."""
    h = jnp.maximum(x, 0.0)
    h1 = h[:, :, ::stride, ::stride]
    hp = jnp.pad(h, ((0, 0), (0, 0), (0, 1), (0, 1)))[:, :, 1:, 1:]
    h2 = hp[:, :, ::stride, ::stride]
    y1 = jnp.einsum('nchw,oc->nohw', h1, w1)
    y2 = jnp.einsum('nchw,oc->nohw', h2, w2)
    y = jnp.concatenate([y1, y2], axis=1)
    mean = y.mean(axis=(0, 2, 3), keepdims=True)
    var = ((y - mean) ** 2).mean(axis=(0, 2, 3), keepdims=True)
    yn = (y - mean) / jnp.sqrt(var + BN_EPS)
    return yn * gamma.reshape(1, -1, 1, 1) + beta.reshape(1, -1, 1, 1)


if __name__ == "__main__":
    # Small shapes consistent with the module: in_ch=4, out_ch=8, stride=2.
    N, Cin, H, W = 2, 4, 16, 16
    Cout, stride = 8, 2
    Co2 = Cout // 2

    key = jax.random.PRNGKey(0)
    kx, kw1, kw2 = jax.random.split(key, 3)
    x = jax.random.normal(kx, (N, Cin, H, W), dtype=jnp.float32)

    # PyTorch Conv2d(in, out, 1) weight is (out, in, 1, 1); stored squeezed as (out, in).
    w1 = jax.random.normal(kw1, (Co2, Cin), dtype=jnp.float32) * (1.0 / np.sqrt(Cin))
    w2 = jax.random.normal(kw2, (Co2, Cin), dtype=jnp.float32) * (1.0 / np.sqrt(Cin))
    # Fresh nn.BatchNorm2d affine params.
    gamma = jnp.ones((Cout,), dtype=jnp.float32)
    beta = jnp.zeros((Cout,), dtype=jnp.float32)

    out = jax.block_until_ready(shortcut_forward(x, w1, w2, gamma, beta, stride))
    ref = jax.block_until_ready(reference_forward(x, w1, w2, gamma, beta, stride))
    np.testing.assert_allclose(np.asarray(out), np.asarray(ref), rtol=1e-4, atol=1e-4)

    print("KERNEL_OK")
</pallas_src>

<mosaic_0001>
module attributes {stable_mosaic.version = 11 : i64} {
  func.func @kernel(%arg0: i32, %arg1: memref<2x4x64xf32, #tpu.memory_space<vmem>>, %arg2: memref<2x4x64xf32, #tpu.memory_space<vmem>>, %arg3: memref<4x1xf32, #tpu.memory_space<vmem>>, %arg4: memref<4x1xf32, #tpu.memory_space<vmem>>, %arg5: memref<4x4xf32, #tpu.memory_space<vmem>>, %arg6: memref<4x4xf32, #tpu.memory_space<vmem>>) attributes {dimension_semantics = [#tpu.dimension_semantics<arbitrary>], iteration_bounds = array<i64: 1>, scalar_prefetch = 0 : i64, scratch_operands = 0 : i64, tpu.core_type = #tpu.core_type<tc>, window_params = [{transform_indices = @transform_0, window_bounds = array<i64: 2, 4, 64>}, {transform_indices = @transform_1, window_bounds = array<i64: 2, 4, 64>}, {pipeline_mode = #tpu.pipeline_mode<synchronous>, transform_indices = @transform_2, window_bounds = array<i64: 4, 1>}, {pipeline_mode = #tpu.pipeline_mode<synchronous>, transform_indices = @transform_3, window_bounds = array<i64: 4, 1>}, {pipeline_mode = #tpu.pipeline_mode<synchronous>, transform_indices = @transform_4, window_bounds = array<i64: 4, 4>}, {pipeline_mode = #tpu.pipeline_mode<synchronous>, transform_indices = @transform_5, window_bounds = array<i64: 4, 4>}]} {
    %c0_i32 = arith.constant 0 : i32
    %0 = arith.cmpi eq, %arg0, %c0_i32 : i32
    %1 = arith.extui %0 : i1 to i32
    %c0_i32_0 = arith.constant 0 : i32
    %2 = arith.cmpi ne, %1, %c0_i32_0 : i32
    scf.if %2 {
      %cst = arith.constant 0.000000e+00 : f32
      %4 = vector.broadcast %cst : f32 to vector<4x1xf32>
      %c0 = arith.constant 0 : index
      %c0_3 = arith.constant 0 : index
      %5 = vector.load %arg3[%c0, %c0_3] : memref<4x1xf32, #tpu.memory_space<vmem>>, vector<4x1xf32>
      tpu.vector_store %arg3[%c0, %c0_3], %4 {strides = array<i32>} : memref<4x1xf32, #tpu.memory_space<vmem>>, vector<4x1xf32>,
      %cst_4 = arith.constant 0.000000e+00 : f32
      %6 = vector.broadcast %cst_4 : f32 to vector<4x1xf32>
      %c0_5 = arith.constant 0 : index
      %c0_6 = arith.constant 0 : index
      %7 = vector.load %arg4[%c0_5, %c0_6] : memref<4x1xf32, #tpu.memory_space<vmem>>, vector<4x1xf32>
      tpu.vector_store %arg4[%c0_5, %c0_6], %6 {strides = array<i32>} : memref<4x1xf32, #tpu.memory_space<vmem>>, vector<4x1xf32>,
      %cst_7 = arith.constant 0.000000e+00 : f32
      %8 = vector.broadcast %cst_7 : f32 to vector<4x4xf32>
      %c0_8 = arith.constant 0 : index
      %c0_9 = arith.constant 0 : index
      %9 = vector.load %arg5[%c0_8, %c0_9] : memref<4x4xf32, #tpu.memory_space<vmem>>, vector<4x4xf32>
      tpu.vector_store %arg5[%c0_8, %c0_9], %8 {strides = array<i32>} : memref<4x4xf32, #tpu.memory_space<vmem>>, vector<4x4xf32>,
      %cst_10 = arith.constant 0.000000e+00 : f32
      %10 = vector.broadcast %cst_10 : f32 to vector<4x4xf32>
      %c0_11 = arith.constant 0 : index
      %c0_12 = arith.constant 0 : index
      %11 = vector.load %arg6[%c0_11, %c0_12] : memref<4x4xf32, #tpu.memory_space<vmem>>, vector<4x4xf32>
      tpu.vector_store %arg6[%c0_11, %c0_12], %10 {strides = array<i32>} : memref<4x4xf32, #tpu.memory_space<vmem>>, vector<4x4xf32>,
    } else {
    }
    %c0_i32_1 = arith.constant 0 : i32
    %c2_i32 = arith.constant 2 : i32
    %3 = arith.addi %c0_i32_1, %c2_i32 : i32
    %c1_i32 = arith.constant 1 : i32
    scf.for %arg7 = %c0_i32_1 to %3 step %c1_i32  : i32 {
      %c1_i32_3 = arith.constant 1 : i32
      %4 = arith.muli %arg7, %c1_i32_3 : i32
      %c0_i32_4 = arith.constant 0 : i32
      %5 = arith.addi %c0_i32_4, %4 : i32
      %6 = arith.index_cast %5 : i32 to index
      %c0 = arith.constant 0 : index
      %c0_5 = arith.constant 0 : index
      %7 = vector.load %arg1[%6, %c0, %c0_5] : memref<2x4x64xf32, #tpu.memory_space<vmem>>, vector<1x4x64xf32>
      %8 = vector.shape_cast %7 : vector<1x4x64xf32> to vector<4x64xf32>
      %cst = arith.constant 0.000000e+00 : f32
      %9 = vector.broadcast %cst : f32 to vector<4x64xf32>
      %10 = arith.maximumf %8, %9 : vector<4x64xf32>
      %11 = arith.index_cast %5 : i32 to index
      %c0_6 = arith.constant 0 : index
      %c0_7 = arith.constant 0 : index
      %12 = vector.load %arg2[%11, %c0_6, %c0_7] : memref<2x4x64xf32, #tpu.memory_space<vmem>>, vector<1x4x64xf32>
      %13 = vector.shape_cast %12 : vector<1x4x64xf32> to vector<4x64xf32>
      %cst_8 = arith.constant 0.000000e+00 : f32
      %14 = vector.broadcast %cst_8 : f32 to vector<4x64xf32>
      %15 = arith.maximumf %13, %14 : vector<4x64xf32>
      %c0_9 = arith.constant 0 : index
      %c0_10 = arith.constant 0 : index
      %16 = vector.load %arg3[%c0_9, %c0_10] : memref<4x1xf32, #tpu.memory_space<vmem>>, vector<4x1xf32>
      %cst_11 = arith.constant dense<0.000000e+00> : vector<4xf32>
      %17 = vector.multi_reduction <add>, %10, %cst_11 [1] : vector<4x64xf32> to vector<4xf32>
      %18 = vector.shape_cast %17 : vector<4xf32> to vector<4x1xf32>
      %19 = arith.addf %16, %18 : vector<4x1xf32>
      %c0_12 = arith.constant 0 : index
      %c0_13 = arith.constant 0 : index
      %20 = vector.load %arg3[%c0_12, %c0_13] : memref<4x1xf32, #tpu.memory_space<vmem>>, vector<4x1xf32>
      tpu.vector_store %arg3[%c0_12, %c0_13], %19 {strides = array<i32>} : memref<4x1xf32, #tpu.memory_space<vmem>>, vector<4x1xf32>,
      %c0_14 = arith.constant 0 : index
      %c0_15 = arith.constant 0 : index
      %21 = vector.load %arg4[%c0_14, %c0_15] : memref<4x1xf32, #tpu.memory_space<vmem>>, vector<4x1xf32>
      %cst_16 = arith.constant dense<0.000000e+00> : vector<4xf32>
      %22 = vector.multi_reduction <add>, %15, %cst_16 [1] : vector<4x64xf32> to vector<4xf32>
      %23 = vector.shape_cast %22 : vector<4xf32> to vector<4x1xf32>
      %24 = arith.addf %21, %23 : vector<4x1xf32>
      %c0_17 = arith.constant 0 : index
      %c0_18 = arith.constant 0 : index
      %25 = vector.load %arg4[%c0_17, %c0_18] : memref<4x1xf32, #tpu.memory_space<vmem>>, vector<4x1xf32>
      tpu.vector_store %arg4[%c0_17, %c0_18], %24 {strides = array<i32>} : memref<4x1xf32, #tpu.memory_space<vmem>>, vector<4x1xf32>,
      %c0_19 = arith.constant 0 : index
      %c0_20 = arith.constant 0 : index
      %26 = vector.load %arg5[%c0_19, %c0_20] : memref<4x4xf32, #tpu.memory_space<vmem>>, vector<4x4xf32>
      %cst_21 = arith.constant dense<0.000000e+00> : vector<4x4xf32>
      %27 = tpu.matmul %10, %10, %cst_21 {dimension_numbers = #tpu.dot_dimension_numbers<[1], [1], [0], [0], [0, 0, 1, 0], [], []>} : vector<4x64xf32>, vector<4x64xf32>, vector<4x4xf32> -> vector<4x4xf32>
      %28 = arith.addf %26, %27 : vector<4x4xf32>
      %c0_22 = arith.constant 0 : index
      %c0_23 = arith.constant 0 : index
      %29 = vector.load %arg5[%c0_22, %c0_23] : memref<4x4xf32, #tpu.memory_space<vmem>>, vector<4x4xf32>
      tpu.vector_store %arg5[%c0_22, %c0_23], %28 {strides = array<i32>} : memref<4x4xf32, #tpu.memory_space<vmem>>, vector<4x4xf32>,
      %c0_24 = arith.constant 0 : index
      %c0_25 = arith.constant 0 : index
      %30 = vector.load %arg6[%c0_24, %c0_25] : memref<4x4xf32, #tpu.memory_space<vmem>>, vector<4x4xf32>
      %cst_26 = arith.constant dense<0.000000e+00> : vector<4x4xf32>
      %31 = tpu.matmul %15, %15, %cst_26 {dimension_numbers = #tpu.dot_dimension_numbers<[1], [1], [0], [0], [0, 0, 1, 0], [], []>} : vector<4x64xf32>, vector<4x64xf32>, vector<4x4xf32> -> vector<4x4xf32>
      %32 = arith.addf %30, %31 : vector<4x4xf32>
      %c0_27 = arith.constant 0 : index
      %c0_28 = arith.constant 0 : index
      %33 = vector.load %arg6[%c0_27, %c0_28] : memref<4x4xf32, #tpu.memory_space<vmem>>, vector<4x4xf32>
      tpu.vector_store %arg6[%c0_27, %c0_28], %32 {strides = array<i32>} : memref<4x4xf32, #tpu.memory_space<vmem>>, vector<4x4xf32>,
    }
    %c2_i32_2 = arith.constant 2 : i32
    return
  }
  func.func @transform_0(%arg0: i32) -> (i32, i32, i32) {
    %c0_i32 = arith.constant 0 : i32
    %c0_i32_0 = arith.constant 0 : i32
    %c0_i32_1 = arith.constant 0 : i32
    return %arg0, %c0_i32, %c0_i32_0 : i32, i32, i32
  }
  func.func @transform_1(%arg0: i32) -> (i32, i32, i32) {
    %c0_i32 = arith.constant 0 : i32
    %c0_i32_0 = arith.constant 0 : i32
    %c0_i32_1 = arith.constant 0 : i32
    return %arg0, %c0_i32, %c0_i32_0 : i32, i32, i32
  }
  func.func @transform_2(%arg0: i32) -> (i32, i32) {
    %c0_i32 = arith.constant 0 : i32
    %c0_i32_0 = arith.constant 0 : i32
    %c0_i32_1 = arith.constant 0 : i32
    return %c0_i32, %c0_i32_0 : i32, i32
  }
  func.func @transform_3(%arg0: i32) -> (i32, i32) {
    %c0_i32 = arith.constant 0 : i32
    %c0_i32_0 = arith.constant 0 : i32
    %c0_i32_1 = arith.constant 0 : i32
    return %c0_i32, %c0_i32_0 : i32, i32
  }
  func.func @transform_4(%arg0: i32) -> (i32, i32) {
    %c0_i32 = arith.constant 0 : i32
    %c0_i32_0 = arith.constant 0 : i32
    %c0_i32_1 = arith.constant 0 : i32
    return %c0_i32, %c0_i32_0 : i32, i32
  }
  func.func @transform_5(%arg0: i32) -> (i32, i32) {
    %c0_i32 = arith.constant 0 : i32
    %c0_i32_0 = arith.constant 0 : i32
    %c0_i32_1 = arith.constant 0 : i32
    return %c0_i32, %c0_i32_0 : i32, i32
  }
}

</mosaic_0001>

<llo_original>
// kernel: tpu_custom_call.1
$region0: #{tpu_custom_call.1}
  #allocation0 [shape = 'u32[]', space=smem, size = 0x4, offset = 0x4, fixed_abs, tag = 'smem constant byte address 0x4 - core index']
  #allocation1 [shape = 'u32[72,128]{1,0:T(1,128)}', space=vmem, size = 0x9000, scoped, tag = 'internal scratch']
  %s0 = inlined_call_operand.hbm [shape: f32[2,4,64], index: 0, kind: input, shape index: {}]
  %s1 = inlined_call_operand.hbm [shape: f32[2,4,64], index: 1, kind: input, shape index: {}]
  %s2 = inlined_call_operand.vmem [shape: f32[4,1], index: 2, kind: output, shape index: {0}]
  %s3 = inlined_call_operand.vmem [shape: f32[4,1], index: 3, kind: output, shape index: {1}]
  %s4 = inlined_call_operand.hbm [shape: f32[4,4], index: 4, kind: output, shape index: {2}]
  %s5 = inlined_call_operand.hbm [shape: f32[4,4], index: 5, kind: output, shape index: {3}]
  %6 = xla_tuple %s2, %s3, %s4, %s5
  %s7 = sld [smem:[#allocation0]]
  $region61: #{tpu_custom_call.1} parent=0
    _
  %s9 = ssub.s32 1, %s7
  %s10 = scalar_select 0, %s9, %s7
  $region1: #{tpu_custom_call.1} parent=0
    #allocation2 [shape = 'u8[4096]{0}', space=vmem, size = 0x1000, scoped, tag = 'input window, operand 0, single buffered']
    #allocation3 [shape = 's32[1]{0}', space=sflag, size = 0x4, scoped, tag = 'scoped memory for tpu_custom_call.1']
    #allocation4 [shape = 's32[1]{0}', space=sflag, size = 0x4, scoped, tag = 'scoped memory for tpu_custom_call.1']
    #allocation5 [shape = 'u8[4096]{0}', space=vmem, size = 0x1000, scoped, tag = 'input window, operand 1, single buffered']
    #allocation6 [shape = 's32[1]{0}', space=sflag, size = 0x4, scoped, tag = 'scoped memory for tpu_custom_call.1']
    #allocation7 [shape = 'u8[2048]{0}', space=vmem, size = 0x800, scoped, tag = 'output window, operand 2, single buffered']
    #allocation8 [shape = 'u8[2048]{0}', space=vmem, size = 0x800, scoped, tag = 'output window, operand 3, single buffered']
    #allocation9 [shape = 's32[1]{0}', space=sflag, size = 0x4, scoped, tag = 'scoped memory for tpu_custom_call.1']
    %11 = vsyncpa [#allocation3], 0
    %12 = vsyncpa [#allocation6], 0
    %13 = vsyncpa [#allocation4], 0
    %14 = vsyncpa [#allocation9], 0
    // Predicated region
    $region2: #{tpu_custom_call.1} parent=1 // pred_check
      _
    $region3: #{tpu_custom_call.1} parent=1 // pred_check_branch
      %16 = sbr.rel (0) target = $region5
    $region4: #{tpu_custom_call.1} parent=1 // pred_region
      %18 = vsyncadd [#allocation3], 0
      %s19 = sshll.u32 %s0, 4
      %s20 = int_to_ptr.hbm [resolvable:$true] %s19
      %s21 = sshll.u32 [#allocation2], 4
      %s22 = int_to_ptr.vmem [resolvable:$true] %s21
      %27 = dma.hbm_to_vmem [thread:$0]  %s20, 128, %s22, [#allocation3], 64, 64, 4
    $region5: #{tpu_custom_call.1} parent=1 // pred_fallthru
      _
    // Predicated region
    $region6: #{tpu_custom_call.1} parent=1 // pred_check
      _
    $region7: #{tpu_custom_call.1} parent=1 // pred_check_branch
      %29 = sbr.rel (0) target = $region9
    $region8: #{tpu_custom_call.1} parent=1 // pred_region
      %31 = vsyncadd [#allocation6], 0
      %s32 = sshll.u32 %s1, 4
      %s33 = int_to_ptr.hbm [resolvable:$true] %s32
      %s34 = sshll.u32 [#allocation5], 4
      %s35 = int_to_ptr.vmem [resolvable:$true] %s34
      %40 = dma.hbm_to_vmem [thread:$0]  %s33, 128, %s35, [#allocation6], 64, 64, 4
    $region9: #{tpu_custom_call.1} parent=1 // pred_fallthru
      _
    // Predicated region
    $region10: #{tpu_custom_call.1} parent=1 // pred_check
      _
    $region11: #{tpu_custom_call.1} parent=1 // pred_check_branch
      %42 = sbr.rel (0) target = $region13
    $region12: #{tpu_custom_call.1} parent=1 // pred_region
      %44 = dma.done [#allocation3], 128
    $region13: #{tpu_custom_call.1} parent=1 // pred_fallthru
      _
    // Predicated region
    $region14: #{tpu_custom_call.1} parent=1 // pred_check
      _
    $region15: #{tpu_custom_call.1} parent=1 // pred_check_branch
      %46 = sbr.rel (0) target = $region17
    $region16: #{tpu_custom_call.1} parent=1 // pred_region
      %48 = dma.done [#allocation6], 128
    $region17: #{tpu_custom_call.1} parent=1 // pred_fallthru
      _
    %p49 = scmp.eq.s32.totalorder 0, 0
    // Predicated region
    $region18: #{tpu_custom_call.1} parent=1 // pred_check
      %p50 = pneg %p49
    $region19: #{tpu_custom_call.1} parent=1 // pred_check_branch
      %52 = sbr.rel (%p50) target = $region21
    $region20: #{tpu_custom_call.1} parent=1 // pred_region
      %vm53 = vcmask 3072
      %54 = vst.msk [vmem:[%s2] sm:$0xf] %vm53, 0.0
      %55 = vst.msk [vmem:[%s3] sm:$0xf] %vm53, 0.0
      %vm56 = vcmask 27648
      %57 = vst.msk [vmem:[#allocation7] sm:$0xf] %vm56, 0.0
      %58 = vst.msk [vmem:[#allocation8] sm:$0xf] %vm56, 0.0
    $region21: #{tpu_custom_call.1} parent=1 // pred_fallthru
      _
    loop: start=0, step=1, limit=2
    $region22: #{tpu_custom_call.1} parent=1 // loop_pre_header
      _
    $region23: #{tpu_custom_call.1} parent=1 // loop_header
      %s60 = sphi 0, %s64
      %p61 = scmp.ge.s32.totalorder %s60, 2
    $region24: #{tpu_custom_call.1} parent=1 // loop_header_branch
      %63 = sbr.rel (%p61) target = $region28
    $region25: #{tpu_custom_call.1} parent=1 // loop_body
      %s65 = smul.u32 %s60, 4
      %s66 = scalar_lea.vmem [#allocation2], %s65
      %v67 = vld [vmem:[%s66] sm:$0xf]
      %v68 = vmax.f32 %v67, 0.0
      %s69 = scalar_lea.vmem [#allocation5], %s65
      %v70 = vld [vmem:[%s69] sm:$0xf]
      %v71 = vmax.f32 %v70, 0.0
      %v72 = vld [vmem:[%s2] sm:$0xf]
      %vm73 = vcmask 519168
      %v74 = vsel %vm73, %v68, 0.0
      %75 = vadd.xlane.f32.xlu0 %v74
      %v76 = vpop.xlane.xlu0 %75
      %v77 = vadd.f32 %v72, %v76
      %vm78 = vcmask 3072
      %79 = vst.msk [vmem:[%s2] sm:$0xf] %vm78, %v77
      %v80 = vld [vmem:[%s3] sm:$0xf]
      %v81 = vsel %vm73, %v71, 0.0
      %82 = vadd.xlane.f32.xlu0 %v81
      %v83 = vpop.xlane.xlu0 %82
      %v84 = vadd.f32 %v80, %v83
      %85 = vst.msk [vmem:[%s3] sm:$0xf] %vm78, %v84
      %v86 = vld [vmem:[#allocation7] sm:$0xf]
      %vm87 = vcmask 523264
      %v89 = vsel %vm87, %v68, 0
      %91 = vmatpush.xpose.msra.mxu0 0.0
      %92 = vmatpush.xpose.msra.mxu0 0.0
      %93 = vmatpush.xpose.msra.mxu0 0.0
      %94 = vmatpush.xpose.msra.mxu0 0.0
      %95 = vmatpush.xpose.msra.mxu0 0.0
      %96 = vmatpush.xpose.msra.mxu0 0.0
      %97 = vmatpush.xpose.msra.mxu0 0.0
      %98 = vmatpush.xpose.msra.mxu0 0.0
      %99 = vmatpush.xpose.msra.mxu0 0.0
      %100 = vmatpush.xpose.msra.mxu0 0.0
      %101 = vmatpush.xpose.msra.mxu0 0.0
      %102 = vmatpush.xpose.msra.mxu0 0.0
      %103 = vmatpush.xpose.msra.mxu0 0.0
      %104 = vmatpush.xpose.msra.mxu0 0.0
      %105 = vmatpush.xpose.msra.mxu0 0.0
      %106 = vmatpush.xpose.msra.mxu0 %v89
      %107 = vmatmul.f32.gmra.mxu0 %v89
      %v108 = vpop.f32.mrf.mxu0
      %v109 = vadd.f32 0.0, %v108
      %110 = vdwg.mxu0
      %v111 = vadd.f32 %v86, %v109
      %vm112 = vcmask 27648
      %113 = vst.msk [vmem:[#allocation7] sm:$0xf] %vm112, %v111
      %v114 = vld [vmem:[#allocation8] sm:$0xf]
      %v116 = vsel %vm87, %v71, 0
      %118 = vmatpush.xpose.msra.mxu0 0.0
      %119 = vmatpush.xpose.msra.mxu0 0.0
      %120 = vmatpush.xpose.msra.mxu0 0.0
      %121 = vmatpush.xpose.msra.mxu0 0.0
      %122 = vmatpush.xpose.msra.mxu0 0.0
      %123 = vmatpush.xpose.msra.mxu0 0.0
      %124 = vmatpush.xpose.msra.mxu0 0.0
      %125 = vmatpush.xpose.msra.mxu0 0.0
      %126 = vmatpush.xpose.msra.mxu0 0.0
      %127 = vmatpush.xpose.msra.mxu0 0.0
      %128 = vmatpush.xpose.msra.mxu0 0.0
      %129 = vmatpush.xpose.msra.mxu0 0.0
      %130 = vmatpush.xpose.msra.mxu0 0.0
      %131 = vmatpush.xpose.msra.mxu0 0.0
      %132 = vmatpush.xpose.msra.mxu0 0.0
      %133 = vmatpush.xpose.msra.mxu0 %v116
      %134 = vmatmul.f32.gmra.mxu0 %v116
      %v135 = vpop.f32.mrf.mxu0
      %v136 = vadd.f32 0.0, %v135
      %137 = vdwg.mxu0
      %v138 = vadd.f32 %v114, %v136
      %139 = vst.msk [vmem:[#allocation8] sm:$0xf] %vm112, %v138
    $region26: #{tpu_custom_call.1} parent=1 // loop_footer
      %s64 = sadd.s32 1, %s60
    $region27: #{tpu_custom_call.1} parent=1 // loop_footer_branch
      %59 = sbr.rel target = $region23
    $region28: #{tpu_custom_call.1} parent=1 // loop_exit
      _
    // Predicated region
    $region29: #{tpu_custom_call.1} parent=1 // pred_check
      _
    $region30: #{tpu_custom_call.1} parent=1 // pred_check_branch
      %141 = sbr.rel (0) target = $region32
    $region31: #{tpu_custom_call.1} parent=1 // pred_region
      _
    $region32: #{tpu_custom_call.1} parent=1 // pred_fallthru
      _
    // Predicated region
    $region33: #{tpu_custom_call.1} parent=1 // pred_check
      _
    $region34: #{tpu_custom_call.1} parent=1 // pred_check_branch
      %143 = sbr.rel (0) target = $region36
    $region35: #{tpu_custom_call.1} parent=1 // pred_region
      _
    $region36: #{tpu_custom_call.1} parent=1 // pred_fallthru
      _
    // Predicated region
    $region37: #{tpu_custom_call.1} parent=1 // pred_check
      _
    $region38: #{tpu_custom_call.1} parent=1 // pred_check_branch
      %145 = sbr.rel (0) target = $region40
    $region39: #{tpu_custom_call.1} parent=1 // pred_region
      %147 = vsyncadd [#allocation4], 0
      %s149 = sshll.u32 [#allocation7], 4
      %s150 = int_to_ptr.vmem [resolvable:$true] %s149
      %s151 = sshll.u32 %s4, 4
      %s152 = int_to_ptr.hbm [resolvable:$true] %s151
      %154 = dma.vmem_to_hbm [thread:$0]  %s150, 64, %s152, [#allocation4]
    $region40: #{tpu_custom_call.1} parent=1 // pred_fallthru
      _
    // Predicated region
    $region41: #{tpu_custom_call.1} parent=1 // pred_check
      _
    $region42: #{tpu_custom_call.1} parent=1 // pred_check_branch
      %156 = sbr.rel (0) target = $region44
    $region43: #{tpu_custom_call.1} parent=1 // pred_region
      %158 = vsyncadd [#allocation9], 0
      %s160 = sshll.u32 [#allocation8], 4
      %s161 = int_to_ptr.vmem [resolvable:$true] %s160
      %s162 = sshll.u32 %s5, 4
      %s163 = int_to_ptr.hbm [resolvable:$true] %s162
      %165 = dma.vmem_to_hbm [thread:$0]  %s161, 64, %s163, [#allocation9]
    $region44: #{tpu_custom_call.1} parent=1 // pred_fallthru
      _
    // Predicated region
    $region45: #{tpu_custom_call.1} parent=1 // pred_check
      _
    $region46: #{tpu_custom_call.1} parent=1 // pred_check_branch
      %167 = sbr.rel (0) target = $region48
    $region47: #{tpu_custom_call.1} parent=1 // pred_region
      _
    $region48: #{tpu_custom_call.1} parent=1 // pred_fallthru
      _
    // Predicated region
    $region49: #{tpu_custom_call.1} parent=1 // pred_check
      _
    $region50: #{tpu_custom_call.1} parent=1 // pred_check_branch
      %169 = sbr.rel (0) target = $region52
    $region51: #{tpu_custom_call.1} parent=1 // pred_region
      _
    $region52: #{tpu_custom_call.1} parent=1 // pred_fallthru
      _
    // Predicated region
    $region53: #{tpu_custom_call.1} parent=1 // pred_check
      _
    $region54: #{tpu_custom_call.1} parent=1 // pred_check_branch
      %171 = sbr.rel (0) target = $region56
    $region55: #{tpu_custom_call.1} parent=1 // pred_region
      %173 = dma.done [#allocation4], 64
    $region56: #{tpu_custom_call.1} parent=1 // pred_fallthru
      _
    // Predicated region
    $region57: #{tpu_custom_call.1} parent=1 // pred_check
      _
    $region58: #{tpu_custom_call.1} parent=1 // pred_check_branch
      %175 = sbr.rel (0) target = $region60
    $region59: #{tpu_custom_call.1} parent=1 // pred_region
      %177 = dma.done [#allocation9], 64
    $region60: #{tpu_custom_call.1} parent=1 // pred_fallthru
      _
    %178 = vsyncpa [#allocation3], 1
    %179 = vsyncpa [#allocation6], 1
    %180 = vsyncpa [#allocation4], 1
    %181 = vsyncpa [#allocation9], 1

</llo_original>
